<compile_context>
chip_gen: v7x
topology: tpu7x:2x2x1
jax: 0.10.0
libtpu: 0.0.40
codegen_flags: <defaults>
</compile_context>

<pallas_src>
import functools

import jax
import jax.numpy as jnp
from jax.experimental import pallas as pl
from jax.experimental.pallas import tpu as pltpu


def _focal_loss_kernel(scores_ref, tgt_ref, part_ref, nll_ref=None, *,
                       gamma, n_rows):
    """One grid step handles a (tile_rows, C) tile of rows."""
    i = pl.program_id(0)

    s = scores_ref[...].astype(jnp.float32)          # (tm, C) f32
    tm, C = s.shape
    tgt = tgt_ref[...]                               # (tm, 1) int32

    # Numerically-stable log-softmax pieces; never materialize full lprobs.
    m = jnp.max(s, axis=-1, keepdims=True)                           # (tm, 1)
    lse = jnp.log(jnp.sum(jnp.exp(s - m), axis=-1, keepdims=True))   # (tm, 1)

    # Gather the target score via a one-hot masked reduce straight off `s`
    # (no second full-tile temporary); lp_t = (s_t - m) - lse.
    col = jax.lax.broadcasted_iota(jnp.int32, (tm, C), 1)
    s_t = jnp.sum(jnp.where(col == tgt, s, 0.0), axis=-1, keepdims=True)
    lp_t = (s_t - m) - lse                           # (tm, 1), log p_target <= 0
    p_t = jnp.exp(lp_t)
    nll = -lp_t                                      # NLLLoss(reduction='none')

    one_minus = jnp.maximum(1.0 - p_t, 0.0)          # clamp tiny negative rounding
    g = float(gamma)
    if g == 0.0:
        w = jnp.ones_like(one_minus)
    elif g == float(int(g)) and 1 <= int(g) <= 4:
        w = one_minus                                # integer gamma: VPU multiplies
        for _ in range(int(g) - 1):
            w = w * one_minus
    else:
        w = jnp.power(one_minus, jnp.float32(g))
    focal = w * nll                                  # (tm, 1)

    def _write(mask_rows):
        if mask_rows:
            # Padded rows of the last block read undefined HBM data; selects
            # (not arithmetic masking) keep any NaN/Inf garbage out of the sum.
            row = jax.lax.broadcasted_iota(jnp.int32, (tm, 1), 0)
            valid = row < (n_rows - i * tm)
            f = jnp.where(valid, focal, 0.0)
            nn = jnp.where(valid, nll, 0.0)
        else:
            f, nn = focal, nll
        # Lane-dense per-tile partial; final reduction happens in the wrapper.
        part_ref[...] = jnp.full((1, 1, 128), jnp.sum(f), dtype=jnp.float32)
        if nll_ref is not None:
            nll_ref[...] = nn

    if n_rows % tm == 0:
        _write(False)                 # no padded rows anywhere -> no mask work
    else:
        last = pl.num_programs(0) - 1

        @pl.when(i == last)
        def _():
            _write(True)

        @pl.when(i != last)
        def _():
            _write(False)


def _pick_tile_rows(n_rows, n_classes, itemsize, target_block_bytes=4 << 20):
    """~4 MiB blocks per tile, sized from the padded (128-lane, f32) footprint."""
    align = 8 * max(1, 4 // int(itemsize))           # 8 for f32, 16 for bf16
    if n_rows <= align:
        return int(n_rows)                           # full-dim block, always legal
    padded_c = -(-int(n_classes) // 128) * 128       # lanes pad to 128
    row_bytes = padded_c * 4                         # f32 after in-kernel upcast
    tr = max(align, (target_block_bytes // row_bytes) // align * align)
    # Largest aligned block not exceeding the array.
    cap = (n_rows // align) * align
    # Megacore (v7x): guarantee >= 2 grid steps so "parallel" can split across
    # the two TensorCores.
    half = align * (-(-n_rows // (2 * align)))
    return int(max(align, min(tr, cap, half)))


def focal_loss(scores, target, gamma, *, tile_rows=None, return_nll_loss=False):
    """scores: [N, C] float (f32 or bf16), target: [N] int, gamma: python float."""
    N, C = scores.shape
    itemsize = jnp.dtype(scores.dtype).itemsize
    if tile_rows is None:
        tile_rows = _pick_tile_rows(N, C, itemsize)
    tile_rows = max(1, min(int(tile_rows), N))
    num_tiles = -(-N // tile_rows)                   # cdiv; last block masked in-kernel

    tgt2d = target.astype(jnp.int32).reshape(N, 1)

    kernel = functools.partial(_focal_loss_kernel, gamma=float(gamma), n_rows=N)

    out_shape = [jax.ShapeDtypeStruct((num_tiles, 1, 128), jnp.float32)]
    out_specs = [pl.BlockSpec((1, 1, 128), lambda i: (i, 0, 0))]
    if return_nll_loss:
        out_shape.append(jax.ShapeDtypeStruct((N, 1), jnp.float32))
        out_specs.append(pl.BlockSpec((tile_rows, 1), lambda i: (i, 0)))

    outs = pl.pallas_call(
        kernel,
        out_shape=tuple(out_shape),
        grid_spec=pltpu.PrefetchScalarGridSpec(
            num_scalar_prefetch=0,
            grid=(num_tiles,),
            in_specs=[
                pl.BlockSpec((tile_rows, C), lambda i: (i, 0)),
                pl.BlockSpec((tile_rows, 1), lambda i: (i, 0)),
            ],
            out_specs=tuple(out_specs),
        ),
        compiler_params=pltpu.CompilerParams(
            dimension_semantics=("parallel",),       # no cross-step state
            vmem_limit_bytes=32 * 1024 * 1024,       # explicit, safe on v5e/v6e/v7x
        ),
    )(scores, tgt2d)

    loss = jnp.sum(outs[0][:, 0, 0])                 # tiny reduce, fused by XLA
    if return_nll_loss:
        return loss, outs[1].reshape(N)
    return loss


if __name__ == "__main__":
    key = jax.random.PRNGKey(0)
    k1, k2, k3, k4 = jax.random.split(key, 4)
    gamma = 2.0

    def ref_focal(scores, target, g):
        lprobs = jax.nn.log_softmax(scores.astype(jnp.float32), axis=-1)
        lp_t = jnp.take_along_axis(lprobs, target[:, None].astype(jnp.int32), axis=1)[:, 0]
        nll = -lp_t
        w = jnp.power(jnp.maximum(1.0 - jnp.exp(lp_t), 0.0), g)
        return jnp.sum(w * nll), nll

    # Case 1: aligned f32, default (sum-only) path, auto tile size (>=2 tiles).
    N, C = 128, 32
    scores = jax.random.normal(k1, (N, C), dtype=jnp.float32)
    target = jax.random.randint(k2, (N,), 0, C, dtype=jnp.int32)
    loss = jax.block_until_ready(focal_loss(scores, target, gamma))
    ref_loss, ref_nll = ref_focal(scores, target, gamma)
    assert jnp.allclose(loss, ref_loss, rtol=1e-5, atol=1e-5), (loss, ref_loss)

    # Case 2: multi-tile grid with per-row nll output.
    loss2, nll2 = focal_loss(scores, target, gamma, tile_rows=32,
                             return_nll_loss=True)
    jax.block_until_ready((loss2, nll2))
    assert jnp.allclose(loss2, ref_loss, rtol=1e-5, atol=1e-5), (loss2, ref_loss)
    assert jnp.allclose(nll2, ref_nll, rtol=1e-5, atol=1e-5)

    # Case 3: ragged row count (exercises last-block masking) with bf16 scores.
    N3, C3 = 100, 48
    scores3 = jax.random.normal(k3, (N3, C3), dtype=jnp.bfloat16)
    target3 = jax.random.randint(k4, (N3,), 0, C3, dtype=jnp.int32)
    loss3 = jax.block_until_ready(focal_loss(scores3, target3, gamma))
    ref_loss3, _ = ref_focal(scores3, target3, gamma)
    assert jnp.allclose(loss3, ref_loss3, rtol=1e-3, atol=1e-2), (loss3, ref_loss3)

    print("KERNEL_OK")
</pallas_src>

<mosaic_0001>
module attributes {stable_mosaic.version = 11 : i64} {
  func.func @_focal_loss_kernel(%arg0: i32, %arg1: memref<64x32xf32, #tpu.memory_space<vmem>>, %arg2: memref<64x1xi32, #tpu.memory_space<vmem>>, %arg3: memref<1x1x128xf32, #tpu.memory_space<vmem>>) attributes {dimension_semantics = [#tpu.dimension_semantics<parallel>], iteration_bounds = array<i64: 2>, scalar_prefetch = 0 : i64, scratch_operands = 0 : i64, tpu.core_type = #tpu.core_type<tc>, window_params = [{transform_indices = @transform_0, window_bounds = array<i64: 64, 32>}, {transform_indices = @transform_1, window_bounds = array<i64: 64, 1>}, {transform_indices = @transform_2, window_bounds = array<i64: 1, 1, 128>}]} {
    %c0 = arith.constant 0 : index
    %c0_0 = arith.constant 0 : index
    %0 = vector.load %arg1[%c0, %c0_0] : memref<64x32xf32, #tpu.memory_space<vmem>>, vector<64x32xf32>
    %c0_1 = arith.constant 0 : index
    %c0_2 = arith.constant 0 : index
    %1 = vector.load %arg2[%c0_1, %c0_2] : memref<64x1xi32, #tpu.memory_space<vmem>>, vector<64x1xi32>
    %cst = arith.constant dense<0xFF800000> : vector<64xf32>
    %2 = vector.multi_reduction <maximumf>, %0, %cst [1] : vector<64x32xf32> to vector<64xf32>
    %3 = vector.shape_cast %2 : vector<64xf32> to vector<64x1xf32>
    %4 = vector.broadcast %3 : vector<64x1xf32> to vector<64x32xf32>
    %5 = arith.subf %0, %4 : vector<64x32xf32>
    %6 = math.exp %5 : vector<64x32xf32>
    %cst_3 = arith.constant dense<0.000000e+00> : vector<64xf32>
    %7 = vector.multi_reduction <add>, %6, %cst_3 [1] : vector<64x32xf32> to vector<64xf32>
    %8 = vector.shape_cast %7 : vector<64xf32> to vector<64x1xf32>
    %9 = math.log %8 : vector<64x1xf32>
    %10 = tpu.iota {dimensions = array<i32: 1>} : vector<64x32xi32>
    %11 = vector.broadcast %1 : vector<64x1xi32> to vector<64x32xi32>
    %12 = arith.cmpi eq, %10, %11 : vector<64x32xi32>
    %cst_4 = arith.constant 0.000000e+00 : f32
    %13 = vector.broadcast %cst_4 : f32 to vector<64x32xf32>
    %14 = arith.select %12, %0, %13 : vector<64x32xi1>, vector<64x32xf32>
    %cst_5 = arith.constant dense<0.000000e+00> : vector<64xf32>
    %15 = vector.multi_reduction <add>, %14, %cst_5 [1] : vector<64x32xf32> to vector<64xf32>
    %16 = vector.shape_cast %15 : vector<64xf32> to vector<64x1xf32>
    %17 = arith.subf %16, %3 : vector<64x1xf32>
    %18 = arith.subf %17, %9 : vector<64x1xf32>
    %19 = math.exp %18 : vector<64x1xf32>
    %cst_6 = arith.constant 0.000000e+00 : f32
    %20 = vector.broadcast %cst_6 : f32 to vector<64x1xf32>
    %21 = arith.subf %20, %18 : vector<64x1xf32>
    %cst_7 = arith.constant 1.000000e+00 : f32
    %22 = vector.broadcast %cst_7 : f32 to vector<64x1xf32>
    %23 = arith.subf %22, %19 : vector<64x1xf32>
    %cst_8 = arith.constant 0.000000e+00 : f32
    %24 = vector.broadcast %cst_8 : f32 to vector<64x1xf32>
    %25 = arith.maximumf %23, %24 : vector<64x1xf32>
    %26 = arith.mulf %25, %25 : vector<64x1xf32>
    %27 = arith.mulf %26, %21 : vector<64x1xf32>
    %28 = vector.shape_cast %27 : vector<64x1xf32> to vector<1x64x1xf32>
    %cst_9 = arith.constant dense<0.000000e+00> : vector<1xf32>
    %29 = vector.multi_reduction <add>, %28, %cst_9 [1, 2] : vector<1x64x1xf32> to vector<1xf32>
    %30 = vector.shape_cast %29 : vector<1xf32> to vector<1x1x1xf32>
    %31 = vector.extract %30[0, 0, 0] : f32 from vector<1x1x1xf32>
    %32 = vector.broadcast %31 : f32 to vector<1x1x128xf32>
    %c0_10 = arith.constant 0 : index
    %c0_11 = arith.constant 0 : index
    %c0_12 = arith.constant 0 : index
    %33 = vector.load %arg3[%c0_10, %c0_11, %c0_12] : memref<1x1x128xf32, #tpu.memory_space<vmem>>, vector<1x1x128xf32>
    tpu.vector_store %arg3[%c0_10, %c0_11, %c0_12], %32 {strides = array<i32>} : memref<1x1x128xf32, #tpu.memory_space<vmem>>, vector<1x1x128xf32>,
    return
  }
  func.func @transform_0(%arg0: i32) -> (i32, i32) {
    %c0_i32 = arith.constant 0 : i32
    %c0_i32_0 = arith.constant 0 : i32
    return %arg0, %c0_i32 : i32, i32
  }
  func.func @transform_1(%arg0: i32) -> (i32, i32) {
    %c0_i32 = arith.constant 0 : i32
    %c0_i32_0 = arith.constant 0 : i32
    return %arg0, %c0_i32 : i32, i32
  }
  func.func @transform_2(%arg0: i32) -> (i32, i32, i32) {
    %c0_i32 = arith.constant 0 : i32
    %c0_i32_0 = arith.constant 0 : i32
    %c0_i32_1 = arith.constant 0 : i32
    return %arg0, %c0_i32, %c0_i32_0 : i32, i32, i32
  }
}

</mosaic_0001>

<llo_original>
// kernel: tpu_custom_call.1
$region0: #{tpu_custom_call.1}
  #allocation0 [shape = 'u32[]', space=smem, size = 0x4, offset = 0x4, fixed_abs, tag = 'smem constant byte address 0x4 - core index']
  #allocation1 [shape = 'u32[144,128]{1,0:T(1,128)}', space=vmem, size = 0x12000, scoped, tag = 'internal scratch']
  %s0 = inlined_call_operand.vmem [shape: f32[128,32], index: 0, kind: input, shape index: {}]
  %s1 = inlined_call_operand.vmem [shape: s32[128,1], index: 1, kind: input, shape index: {}]
  %s2 = inlined_call_operand.hbm [shape: f32[2,1,128], index: 2, kind: output, shape index: {}]
  %s3 = sld [smem:[#allocation0]]
  $region41: #{tpu_custom_call.1} parent=0
    _
  %s5 = ssub.s32 1, %s3
  %s6 = scalar_select 0, %s5, %s3
  $region1: #{tpu_custom_call.1} parent=0
    #allocation2 [shape = 'u8[1024]{0}', space=vmem, size = 0x400, scoped, tag = 'output window, operand 0']
    #allocation3 [shape = 's32[2]{0}', space=sflag, size = 0x8, scoped, tag = 'scoped memory for tpu_custom_call.1']
    %7 = vsyncpa [#allocation3], 0
    %s8 = scalar_lea.sflag [#allocation3], 1
    %9 = vsyncpa %s8, 0
    loop: start=0, step=1, limit=4
    $region2: #{tpu_custom_call.1} parent=1 // loop_pre_header
      _
    $region3: #{tpu_custom_call.1} parent=1 // loop_header
      %s11 = sphi 0, %s15
      %p12 = scmp.ge.s32.totalorder %s11, 4
      %s21 = sphi 0, %s23
      %s24 = sphi 0, %s21
      %s25 = sphi 0, %s24
      %s41 = sphi 0, %s25
      %s47 = sphi 0, %s49
      %s50 = sphi 0, %s47
      %s51 = sphi 0, %s50
      %s67 = sphi 0, %s51
      %s73 = sphi 0, %s75
      %s76 = sphi 0, %s73
      %s77 = sphi 0, %s76
      %s93 = sphi 0, %s77
    $region4: #{tpu_custom_call.1} parent=1 // loop_header_branch
      %14 = sbr.rel (%p12) target = $region8
    $region5: #{tpu_custom_call.1} parent=1 // loop_body
      %s16 = ssub.s32 %s11, 1
      %s17 = ssub.s32 %s11, 2
      %s18 = sadd.s32 %s11, 1
      %s19 = ssub.s32 %s11, %s18
      %p20 = scmp.eq.s32.totalorder %s19, 0
      %s22 = sadd.s32 %s21, 1
      %s23 = scalar_select %p20, %s21, %s22
      %p26 = pneg %p20
      %p27 = scmp.eq.s32.totalorder %s11, 1
      %p28 = por %p26, %p27
      %p29 = scmp.ne.s32.totalorder %s21, %s24
      %p30 = scmp.eq.s32.totalorder %s11, 0
      %p31 = por %p29, %p30
      %p32 = scmp.ne.s32.totalorder %s21, %s24
      %p33 = scmp.eq.s32.totalorder %s16, 1
      %p34 = por %p32, %p33
      %p35 = scmp.ne.s32.totalorder %s24, %s25
      %p36 = scmp.eq.s32.totalorder %s16, 0
      %p37 = por %p35, %p36
      %p38 = scmp.ne.s32.totalorder %s24, %s25
      %p39 = scmp.eq.s32.totalorder %s17, 1
      %p40 = por %p38, %p39
      %p42 = scmp.ne.s32.totalorder %s25, %s41
      %p43 = scmp.eq.s32.totalorder %s17, 0
      %p44 = por %p42, %p43
      %s45 = ssub.s32 %s11, %s18
      %p46 = scmp.eq.s32.totalorder %s45, 0
      %s48 = sadd.s32 %s47, 1
      %s49 = scalar_select %p46, %s47, %s48
      %p52 = pneg %p46
      %p53 = scmp.eq.s32.totalorder %s11, 1
      %p54 = por %p52, %p53
      %p55 = scmp.ne.s32.totalorder %s47, %s50
      %p56 = scmp.eq.s32.totalorder %s11, 0
      %p57 = por %p55, %p56
      %p58 = scmp.ne.s32.totalorder %s47, %s50
      %p59 = scmp.eq.s32.totalorder %s16, 1
      %p60 = por %p58, %p59
      %p61 = scmp.ne.s32.totalorder %s50, %s51
      %p62 = scmp.eq.s32.totalorder %s16, 0
      %p63 = por %p61, %p62
      %p64 = scmp.ne.s32.totalorder %s50, %s51
      %p65 = scmp.eq.s32.totalorder %s17, 1
      %p66 = por %p64, %p65
      %p68 = scmp.ne.s32.totalorder %s51, %s67
      %p69 = scmp.eq.s32.totalorder %s17, 0
      %p70 = por %p68, %p69
      %s71 = ssub.s32 %s11, %s18
      %p72 = scmp.eq.s32.totalorder %s71, 0
      %s74 = sadd.s32 %s73, 1
      %s75 = scalar_select %p72, %s73, %s74
      %p78 = pneg %p72
      %p79 = scmp.eq.s32.totalorder %s11, 1
      %p80 = por %p78, %p79
      %p81 = scmp.ne.s32.totalorder %s73, %s76
      %p82 = scmp.eq.s32.totalorder %s11, 0
      %p83 = por %p81, %p82
      %p84 = scmp.ne.s32.totalorder %s73, %s76
      %p85 = scmp.eq.s32.totalorder %s16, 1
      %p86 = por %p84, %p85
      %p87 = scmp.ne.s32.totalorder %s76, %s77
      %p88 = scmp.eq.s32.totalorder %s16, 0
      %p89 = por %p87, %p88
      %p90 = scmp.ne.s32.totalorder %s76, %s77
      %p91 = scmp.eq.s32.totalorder %s17, 1
      %p92 = por %p90, %p91
      %p94 = scmp.ne.s32.totalorder %s77, %s93
      %p95 = scmp.eq.s32.totalorder %s17, 0
      %p96 = por %p94, %p95
      %p97 = scmp.le.s32.totalorder 1, %s11
      %p98 = scmp.lt.s32.totalorder %s11, 3
      %p99 = pnand %p97, %p98
      %p100 = pneg %p99
      // Predicated region
      $region9: #{tpu_custom_call.1} parent=5 // pred_check
        _
      $region10: #{tpu_custom_call.1} parent=5 // pred_check_branch
        %102 = sbr.rel (%p99) target = $region12
      $region11: #{tpu_custom_call.1} parent=5 // pred_region
        %s103 = ssub.s32 %s11, 1
      $region12: #{tpu_custom_call.1} parent=5 // pred_fallthru
        _
      %p104 = scmp.lt.s32.totalorder %s11, 2
      // Predicated region
      $region13: #{tpu_custom_call.1} parent=5 // pred_check
        %p105 = pneg %p104
      $region14: #{tpu_custom_call.1} parent=5 // pred_check_branch
        %107 = sbr.rel (%p105) target = $region16
      $region15: #{tpu_custom_call.1} parent=5 // pred_region
        // Predicated region
        $region17: #{tpu_custom_call.1} parent=15 // pred_check
          %p108 = pneg %p31
        $region18: #{tpu_custom_call.1} parent=15 // pred_check_branch
          %110 = sbr.rel (%p108) target = $region20
        $region19: #{tpu_custom_call.1} parent=15 // pred_region
          %s111 = smul.u32 8, %s11
          %p112 = scmp.lt.s32.totalorder %s111, 15
          %s113 = scalar_select %p112, %s111, 15
          %s114 = smul.addr %s113, 8
          %s115 = scalar_lea.vmem %s0, %s114
          %s116 = smul.u32 8, %s11
        $region20: #{tpu_custom_call.1} parent=15 // pred_fallthru
          _
        // Predicated region
        $region21: #{tpu_custom_call.1} parent=15 // pred_check
          %p117 = pneg %p57
        $region22: #{tpu_custom_call.1} parent=15 // pred_check_branch
          %119 = sbr.rel (%p117) target = $region24
        $region23: #{tpu_custom_call.1} parent=15 // pred_region
          %s120 = smul.u32 8, %s11
          %p121 = scmp.lt.s32.totalorder %s120, 15
          %s122 = scalar_select %p121, %s120, 15
          %s123 = smul.addr %s122, 8
          %s124 = scalar_lea.vmem %s1, %s123
          %s125 = smul.u32 8, %s11
        $region24: #{tpu_custom_call.1} parent=15 // pred_fallthru
          _
      $region16: #{tpu_custom_call.1} parent=5 // pred_fallthru
        _
      %p126 = scmp.le.s32.totalorder 1, %s11
      %p127 = scmp.lt.s32.totalorder %s11, 3
      %p128 = pnand %p126, %p127
      %p129 = pneg %p128
      // Predicated region
      $region25: #{tpu_custom_call.1} parent=5 // pred_check
        _
      $region26: #{tpu_custom_call.1} parent=5 // pred_check_branch
        %131 = sbr.rel (%p128) target = $region28
      $region27: #{tpu_custom_call.1} parent=5 // pred_region
        %s132 = ssub.s32 %s11, 1
        %s133 = smul.u32 8, %s16
        %p134 = scmp.lt.s32.totalorder %s133, 15
        %s135 = scalar_select %p134, %s133, 15
        %s136 = smul.addr %s135, 8
        %s137 = scalar_lea.vmem %s0, %s136
        %p138 = pneg %p37
        %p139 = pneg %p34
        %s140 = smul.u32 8, %s16
        %p141 = scmp.lt.s32.totalorder %s140, 15
        %s142 = scalar_select %p141, %s140, 15
        %s143 = smul.addr %s142, 8
        %s144 = scalar_lea.vmem %s1, %s143
        %p145 = pneg %p63
        %p146 = pneg %p60
        %p147 = pneg %p89
        %p148 = pneg %p86
        %s149 = sand.u32 %s76, 1
        %s150 = scalar_lea.sflag [#allocation3], %s149
        %s151 = sand.u32 %s76, 1
        %s152 = scalar_lea.vmem [#allocation2], %s151
        %s153 = smul.u32 8, %s16
        %p154 = scmp.lt.s32.totalorder %s153, 15
        %s155 = scalar_select %p154, %s153, 15
        %s156 = smul.addr %s155, 8
        %s157 = scalar_lea.vmem %s0, %s156
        %s158 = smul.u32 8, %s16
        %s159 = smul.u32 8, %s16
        %p160 = scmp.lt.s32.totalorder %s159, 15
        %s161 = scalar_select %p160, %s159, 15
        %s162 = smul.addr %s161, 8
        %s163 = scalar_lea.vmem %s1, %s162
        %s164 = smul.u32 8, %s16
        %v165 = vld [vmem:[%s157] sm:$0xff]
        %v166 = vld [vmem:[%s157 + $0x8] sm:$0xff]
        %v167 = vld [vmem:[%s157 + $0x10] sm:$0xff]
        %v168 = vld [vmem:[%s157 + $0x18] sm:$0xff]
        %v169 = vld [vmem:[%s157 + $0x20] sm:$0xff]
        %v170 = vld [vmem:[%s157 + $0x28] sm:$0xff]
        %v171 = vld [vmem:[%s157 + $0x30] sm:$0xff]
        %v172 = vld [vmem:[%s157 + $0x38] sm:$0xff]
        %v173 = vld [vmem:[%s163] sm:$0xff]
        %v174 = vld [vmem:[%s163 + $0x8] sm:$0xff]
        %v175 = vld [vmem:[%s163 + $0x10] sm:$0xff]
        %v176 = vld [vmem:[%s163 + $0x18] sm:$0xff]
        %v177 = vld [vmem:[%s163 + $0x20] sm:$0xff]
        %v178 = vld [vmem:[%s163 + $0x28] sm:$0xff]
        %v179 = vld [vmem:[%s163 + $0x30] sm:$0xff]
        %v180 = vld [vmem:[%s163 + $0x38] sm:$0xff]
        %vm181 = vcmask 261120
        %v182 = vsel %vm181, %v165, -inf
        %183 = vmax.xlane.f32.xlu0 %v182
        %v184 = vpop.xlane.xlu0 %183
        %v185 = vsel %vm181, %v166, -inf
        %186 = vmax.xlane.f32.xlu0 %v185
        %v187 = vpop.xlane.xlu0 %186
        %v188 = vsel %vm181, %v167, -inf
        %189 = vmax.xlane.f32.xlu0 %v188
        %v190 = vpop.xlane.xlu0 %189
        %v191 = vsel %vm181, %v168, -inf
        %192 = vmax.xlane.f32.xlu0 %v191
        %v193 = vpop.xlane.xlu0 %192
        %v194 = vsel %vm181, %v169, -inf
        %195 = vmax.xlane.f32.xlu0 %v194
        %v196 = vpop.xlane.xlu0 %195
        %v197 = vsel %vm181, %v170, -inf
        %198 = vmax.xlane.f32.xlu0 %v197
        %v199 = vpop.xlane.xlu0 %198
        %v200 = vsel %vm181, %v171, -inf
        %201 = vmax.xlane.f32.xlu0 %v200
        %v202 = vpop.xlane.xlu0 %201
        %v203 = vsel %vm181, %v172, -inf
        %204 = vmax.xlane.f32.xlu0 %v203
        %v205 = vpop.xlane.xlu0 %204
        %v206 = vsub.f32 %v165, %v184
        %v207 = vsub.f32 %v166, %v187
        %v208 = vsub.f32 %v167, %v190
        %v209 = vsub.f32 %v168, %v193
        %v210 = vsub.f32 %v169, %v196
        %v211 = vsub.f32 %v170, %v199
        %v212 = vsub.f32 %v171, %v202
        %v213 = vsub.f32 %v172, %v205
        %v214 = vmul.f32 %v206, 1.442695
        %v215 = vpow.pop %v214
        %v216 = vmul.f32 %v207, 1.442695
        %v217 = vpow.pop %v216
        %v218 = vmul.f32 %v208, 1.442695
        %v219 = vpow.pop %v218
        %v220 = vmul.f32 %v209, 1.442695
        %v221 = vpow.pop %v220
        %v222 = vmul.f32 %v210, 1.442695
        %v223 = vpow.pop %v222
        %v224 = vmul.f32 %v211, 1.442695
        %v225 = vpow.pop %v224
        %v226 = vmul.f32 %v212, 1.442695
        %v227 = vpow.pop %v226
        %v228 = vmul.f32 %v213, 1.442695
        %v229 = vpow.pop %v228
        %v230 = vsel %vm181, %v215, 0.0
        %231 = vadd.xlane.f32.xlu0 %v230
        %v232 = vpop.xlane.xlu0 %231
        %v233 = vsel %vm181, %v217, 0.0
        %234 = vadd.xlane.f32.xlu0 %v233
        %v235 = vpop.xlane.xlu0 %234
        %v236 = vsel %vm181, %v219, 0.0
        %237 = vadd.xlane.f32.xlu0 %v236
        %v238 = vpop.xlane.xlu0 %237
        %v239 = vsel %vm181, %v221, 0.0
        %240 = vadd.xlane.f32.xlu0 %v239
        %v241 = vpop.xlane.xlu0 %240
        %v242 = vsel %vm181, %v223, 0.0
        %243 = vadd.xlane.f32.xlu0 %v242
        %v244 = vpop.xlane.xlu0 %243
        %v245 = vsel %vm181, %v225, 0.0
        %246 = vadd.xlane.f32.xlu0 %v245
        %v247 = vpop.xlane.xlu0 %246
        %v248 = vsel %vm181, %v227, 0.0
        %249 = vadd.xlane.f32.xlu0 %v248
        %v250 = vpop.xlane.xlu0 %249
        %v251 = vsel %vm181, %v229, 0.0
        %252 = vadd.xlane.f32.xlu0 %v251
        %v253 = vpop.xlane.xlu0 %252
        %v254 = vlog2.pop %v232
        %v255 = vmul.f32 %v254, 0.6931472
        %v256 = vlog2.pop %v235
        %v257 = vmul.f32 %v256, 0.6931472
        %v258 = vlog2.pop %v238
        %v259 = vmul.f32 %v258, 0.6931472
        %v260 = vlog2.pop %v241
        %v261 = vmul.f32 %v260, 0.6931472
        %v262 = vlog2.pop %v244
        %v263 = vmul.f32 %v262, 0.6931472
        %v264 = vlog2.pop %v247
        %v265 = vmul.f32 %v264, 0.6931472
        %v266 = vlog2.pop %v250
        %v267 = vmul.f32 %v266, 0.6931472
        %v268 = vlog2.pop %v253
        %v269 = vmul.f32 %v268, 0.6931472
        %v270 = vlaneseq
        %v271 = vand.u32 %v270, 127
        %272 = vset.pattern.permute.xlu0 0
        %273 = vperm.xlu0 %272, %v173
        %v274 = vpop.permute.xlu0 %273
        %275 = vset.pattern.permute.xlu0 0
        %276 = vperm.xlu0 %275, %v174
        %v277 = vpop.permute.xlu0 %276
        %278 = vset.pattern.permute.xlu0 0
        %279 = vperm.xlu0 %278, %v175
        %v280 = vpop.permute.xlu0 %279
        %281 = vset.pattern.permute.xlu0 0
        %282 = vperm.xlu0 %281, %v176
        %v283 = vpop.permute.xlu0 %282
        %284 = vset.pattern.permute.xlu0 0
        %285 = vperm.xlu0 %284, %v177
        %v286 = vpop.permute.xlu0 %285
        %287 = vset.pattern.permute.xlu0 0
        %288 = vperm.xlu0 %287, %v178
        %v289 = vpop.permute.xlu0 %288
        %290 = vset.pattern.permute.xlu0 0
        %291 = vperm.xlu0 %290, %v179
        %v292 = vpop.permute.xlu0 %291
        %293 = vset.pattern.permute.xlu0 0
        %294 = vperm.xlu0 %293, %v180
        %v295 = vpop.permute.xlu0 %294
        %vm296 = vcmp.eq.s32.totalorder %v271, %v274
        %vm297 = vcmp.eq.s32.totalorder %v271, %v277
        %vm298 = vcmp.eq.s32.totalorder %v271, %v280
        %vm299 = vcmp.eq.s32.totalorder %v271, %v283
        %vm300 = vcmp.eq.s32.totalorder %v271, %v286
        %vm301 = vcmp.eq.s32.totalorder %v271, %v289
        %vm302 = vcmp.eq.s32.totalorder %v271, %v292
        %vm303 = vcmp.eq.s32.totalorder %v271, %v295
        %v304 = vsel %vm296, %v165, 0.0
        %v305 = vsel %vm297, %v166, 0.0
        %v306 = vsel %vm298, %v167, 0.0
        %v307 = vsel %vm299, %v168, 0.0
        %v308 = vsel %vm300, %v169, 0.0
        %v309 = vsel %vm301, %v170, 0.0
        %v310 = vsel %vm302, %v171, 0.0
        %v311 = vsel %vm303, %v172, 0.0
        %v312 = vsel %vm181, %v304, 0.0
        %313 = vadd.xlane.f32.xlu0 %v312
        %v314 = vpop.xlane.xlu0 %313
        %v315 = vsel %vm181, %v305, 0.0
        %316 = vadd.xlane.f32.xlu0 %v315
        %v317 = vpop.xlane.xlu0 %316
        %v318 = vsel %vm181, %v306, 0.0
        %319 = vadd.xlane.f32.xlu0 %v318
        %v320 = vpop.xlane.xlu0 %319
        %v321 = vsel %vm181, %v307, 0.0
        %322 = vadd.xlane.f32.xlu0 %v321
        %v323 = vpop.xlane.xlu0 %322
        %v324 = vsel %vm181, %v308, 0.0
        %325 = vadd.xlane.f32.xlu0 %v324
        %v326 = vpop.xlane.xlu0 %325
        %v327 = vsel %vm181, %v309, 0.0
        %328 = vadd.xlane.f32.xlu0 %v327
        %v329 = vpop.xlane.xlu0 %328
        %v330 = vsel %vm181, %v310, 0.0
        %331 = vadd.xlane.f32.xlu0 %v330
        %v332 = vpop.xlane.xlu0 %331
        %v333 = vsel %vm181, %v311, 0.0
        %334 = vadd.xlane.f32.xlu0 %v333
        %v335 = vpop.xlane.xlu0 %334
        %v336 = vsub.f32 %v314, %v184
        %v337 = vsub.f32 %v317, %v187
        %v338 = vsub.f32 %v320, %v190
        %v339 = vsub.f32 %v323, %v193
        %v340 = vsub.f32 %v326, %v196
        %v341 = vsub.f32 %v329, %v199
        %v342 = vsub.f32 %v332, %v202
        %v343 = vsub.f32 %v335, %v205
        %v344 = vsub.f32 %v336, %v255
        %v345 = vsub.f32 %v337, %v257
        %v346 = vsub.f32 %v338, %v259
        %v347 = vsub.f32 %v339, %v261
        %v348 = vsub.f32 %v340, %v263
        %v349 = vsub.f32 %v341, %v265
        %v350 = vsub.f32 %v342, %v267
        %v351 = vsub.f32 %v343, %v269
        %v352 = vmul.f32 %v344, 1.442695
        %v353 = vpow.pop %v352
        %v354 = vmul.f32 %v345, 1.442695
        %v355 = vpow.pop %v354
        %v356 = vmul.f32 %v346, 1.442695
        %v357 = vpow.pop %v356
        %v358 = vmul.f32 %v347, 1.442695
        %v359 = vpow.pop %v358
        %v360 = vmul.f32 %v348, 1.442695
        %v361 = vpow.pop %v360
        %v362 = vmul.f32 %v349, 1.442695
        %v363 = vpow.pop %v362
        %v364 = vmul.f32 %v350, 1.442695
        %v365 = vpow.pop %v364
        %v366 = vmul.f32 %v351, 1.442695
        %v367 = vpow.pop %v366
        %v368 = vsub.f32 0.0, %v344
        %v369 = vsub.f32 0.0, %v345
        %v370 = vsub.f32 0.0, %v346
        %v371 = vsub.f32 0.0, %v347
        %v372 = vsub.f32 0.0, %v348
        %v373 = vsub.f32 0.0, %v349
        %v374 = vsub.f32 0.0, %v350
        %v375 = vsub.f32 0.0, %v351
        %v376 = vsub.f32 1.0, %v353
        %v377 = vsub.f32 1.0, %v355
        %v378 = vsub.f32 1.0, %v357
        %v379 = vsub.f32 1.0, %v359
        %v380 = vsub.f32 1.0, %v361
        %v381 = vsub.f32 1.0, %v363
        %v382 = vsub.f32 1.0, %v365
        %v383 = vsub.f32 1.0, %v367
        %v384 = vmax.f32 %v376, 0.0
        %v385 = vmax.f32 %v377, 0.0
        %v386 = vmax.f32 %v378, 0.0
        %v387 = vmax.f32 %v379, 0.0
        %v388 = vmax.f32 %v380, 0.0
        %v389 = vmax.f32 %v381, 0.0
        %v390 = vmax.f32 %v382, 0.0
        %v391 = vmax.f32 %v383, 0.0
        %v392 = vmul.f32 %v384, %v384
        %v393 = vmul.f32 %v385, %v385
        %v394 = vmul.f32 %v386, %v386
        %v395 = vmul.f32 %v387, %v387
        %v396 = vmul.f32 %v388, %v388
        %v397 = vmul.f32 %v389, %v389
        %v398 = vmul.f32 %v390, %v390
        %v399 = vmul.f32 %v391, %v391
        %v400 = vmul.f32 %v392, %v368
        %v401 = vmul.f32 %v393, %v369
        %v402 = vmul.f32 %v394, %v370
        %v403 = vmul.f32 %v395, %v371
        %v404 = vmul.f32 %v396, %v372
        %v405 = vmul.f32 %v397, %v373
        %v406 = vmul.f32 %v398, %v374
        %v407 = vmul.f32 %v399, %v375
        %vm408 = vcmask 7168
        %v409 = vsel %vm408, %v400, 0.0
        %v410 = vsel %vm408, %v401, 0.0
        %v411 = vadd.f32 %v409, %v410
        %v412 = vsel %vm408, %v402, 0.0
        %v413 = vadd.f32 %v411, %v412
        %v414 = vsel %vm408, %v403, 0.0
        %v415 = vadd.f32 %v413, %v414
        %v416 = vsel %vm408, %v404, 0.0
        %v417 = vadd.f32 %v415, %v416
        %v418 = vsel %vm408, %v405, 0.0
        %v419 = vadd.f32 %v417, %v418
        %v420 = vsel %vm408, %v406, 0.0
        %v421 = vadd.f32 %v419, %v420
        %v422 = vsel %vm408, %v407, 0.0
        %v423 = vadd.f32 %v421, %v422
        %424 = vadd.xlane.f32.xlu0 %v423
        %v425 = vpop.xlane.xlu0 %424
        %v426 = vrot.slane %v425, 4
        %v427 = vadd.f32 %v425, %v426
        %v428 = vrot.slane %v427, 2
        %v429 = vadd.f32 %v427, %v428
        %v430 = vrot.slane %v429, 1
        %v431 = vadd.f32 %v429, %v430
        %s432 = vtos %v431
        %v433 = vstv %s432
        %434 = vst [vmem:[%s152] sm:$0x1] %v433
        %s435 = sand.u32 %s76, 1
        %s436 = scalar_lea.sflag [#allocation3], %s435
        %s437 = sand.u32 %s76, 1
        %s438 = scalar_lea.vmem [#allocation2], %s437
        // Predicated region
        $region29: #{tpu_custom_call.1} parent=27 // pred_check
          %p439 = pneg %p86
        $region30: #{tpu_custom_call.1} parent=27 // pred_check_branch
          %441 = sbr.rel (%p439) target = $region32
        $region31: #{tpu_custom_call.1} parent=27 // pred_region
          %s443 = ssub.s32 16, 16
          %444 = vsyncadd %s436, %s443
          %s445 = smul.addr %s16, 16
          %s446 = scalar_lea.hbm %s2, %s445
          %s448 = sshll.u32 %s438, 4
          %s449 = int_to_ptr.vmem [resolvable:$true] %s448
          %451 = dma.vmem_to_hbm [thread:$0]  %s449, 16, %s446, %s436
        $region32: #{tpu_custom_call.1} parent=27 // pred_fallthru
          _
      $region28: #{tpu_custom_call.1} parent=5 // pred_fallthru
        _
      %p452 = scmp.le.s32.totalorder 2, %s11
      // Predicated region
      $region33: #{tpu_custom_call.1} parent=5 // pred_check
        %p453 = pneg %p452
      $region34: #{tpu_custom_call.1} parent=5 // pred_check_branch
        %455 = sbr.rel (%p453) target = $region36
      $region35: #{tpu_custom_call.1} parent=5 // pred_region
        %s456 = ssub.s32 %s11, 2
        // Predicated region
        $region37: #{tpu_custom_call.1} parent=35 // pred_check
          %p457 = pneg %p92
        $region38: #{tpu_custom_call.1} parent=35 // pred_check_branch
          %459 = sbr.rel (%p457) target = $region40
        $region39: #{tpu_custom_call.1} parent=35 // pred_region
          %s460 = sand.u32 %s77, 1
          %s461 = scalar_lea.sflag [#allocation3], %s460
          %s462 = sand.u32 %s77, 1
          %s463 = scalar_lea.vmem [#allocation2], %s462
          %464 = dma.done %s461, 16
        $region40: #{tpu_custom_call.1} parent=35 // pred_fallthru
          _
      $region36: #{tpu_custom_call.1} parent=5 // pred_fallthru
        _
    $region6: #{tpu_custom_call.1} parent=1 // loop_footer
      %s15 = sadd.s32 1, %s11
    $region7: #{tpu_custom_call.1} parent=1 // loop_footer_branch
      %10 = sbr.rel target = $region3
    $region8: #{tpu_custom_call.1} parent=1 // loop_exit
      _
    %465 = vsyncpa [#allocation3], 1
    %s466 = scalar_lea.sflag [#allocation3], 1
    %467 = vsyncpa %s466, 1

</llo_original>
